<compile_context>
chip_gen: v6e
topology: v6e:2x2x1
jax: 0.10.0
libtpu: 0.0.40
codegen_flags: <defaults>
</compile_context>

<pallas_src>
import functools

import jax
import jax.numpy as jnp
from jax.experimental import pallas as pl
from jax.experimental.pallas import tpu as pltpu


def _depthwise_conv_kernel(x_ref, w_ref, b_ref, y_ref, *, k_h, k_w,
                           stride, dilation, out_h, out_w):
    # x_ref: (1, C, Hp, Wp) spatially padded input for one batch element.
    # w_ref: (kH*kW, C, 1, 1) depthwise taps (f32).
    # b_ref: (C, 1, 1) depthwise bias (f32).
    # y_ref: (1, C, Ho, Wo) depthwise output.
    x = x_ref[0].astype(jnp.float32)          # (C, Hp, Wp)
    w = w_ref[...]                            # (kH*kW, C, 1, 1)
    c = x.shape[0]

    acc = jnp.zeros((c, out_h, out_w), jnp.float32)
    for k in range(k_h * k_w):                # static tap loop (small)
        kh = k // k_w
        kw = k % k_w
        h0 = kh * dilation
        w0 = kw * dilation
        xs = jax.lax.slice(
            x,
            (0, h0, w0),
            (c, h0 + (out_h - 1) * stride + 1, w0 + (out_w - 1) * stride + 1),
            (1, stride, stride))              # (C, Ho, Wo)
        acc = acc + xs * w[k]                 # (C, Ho, Wo) * (C, 1, 1)

    acc = acc + b_ref[...]                    # (C, 1, 1) broadcast
    y_ref[0] = acc.astype(y_ref.dtype)


def _bn_pointwise_kernel(y_ref, scale_ref, shift_ref, w_ref, b_ref, o_ref):
    # y_ref:     (1, C, S)   depthwise output, spatial flattened (lane-dense).
    # scale_ref: (C, 1)      fused BN scale  = gamma / sqrt(var + eps).
    # shift_ref: (C, 1)      fused BN shift  = beta - mean * scale.
    # w_ref:     (Cout, C)   pointwise weights (f32).
    # b_ref:     (Cout, 1)   pointwise bias (f32).
    # o_ref:     (1, Cout, S)
    y = y_ref[0].astype(jnp.float32)                          # (C, S)
    y = y * scale_ref[...] + shift_ref[...]                   # BN affine
    out = jnp.dot(w_ref[...], y, preferred_element_type=jnp.float32)  # (Cout, S)
    out = out + b_ref[...]
    o_ref[0] = out.astype(o_ref.dtype)


def depthwise_separable_conv(x, w_dw, b_dw, gamma, beta, w_pw, b_pw, *,
                             stride=1, padding=0, dilation=1, eps=1e-5):
    """Forward of the PyTorch DepthwiseSeparableConv module.

    x:     (N, C, H, W)
    w_dw:  (C, 1, kH, kW)  depthwise weights (groups=C, PyTorch layout)
    b_dw:  (C,)            depthwise bias
    gamma, beta: (C,)      BatchNorm2d affine parameters
    w_pw:  (Cout, C, 1, 1) pointwise weights
    b_pw:  (Cout,)         pointwise bias
    """
    N, C, H, W = x.shape
    Cout = w_pw.shape[0]
    kH, kW = w_dw.shape[2], w_dw.shape[3]
    Ho = (H + 2 * padding - dilation * (kH - 1) - 1) // stride + 1
    Wo = (W + 2 * padding - dilation * (kW - 1) - 1) // stride + 1
    dtype = x.dtype

    # ---------------- depthwise conv + bias ----------------
    xp = jnp.pad(x, ((0, 0), (0, 0), (padding, padding), (padding, padding)))
    Hp, Wp = H + 2 * padding, W + 2 * padding

    # (C, 1, kH, kW) -> (kH*kW, C, 1, 1): one per-channel column per tap.
    w_dw_k = jnp.transpose(w_dw.reshape(C, kH * kW), (1, 0)).reshape(
        kH * kW, C, 1, 1).astype(jnp.float32)
    b_dw_k = b_dw.reshape(C, 1, 1).astype(jnp.float32)

    y = pl.pallas_call(
        functools.partial(_depthwise_conv_kernel, k_h=kH, k_w=kW,
                          stride=stride, dilation=dilation,
                          out_h=Ho, out_w=Wo),
        out_shape=jax.ShapeDtypeStruct((N, C, Ho, Wo), dtype),
        grid=(N,),
        in_specs=[
            pl.BlockSpec((1, C, Hp, Wp), lambda n: (n, 0, 0, 0)),
            pl.BlockSpec((kH * kW, C, 1, 1), lambda n: (0, 0, 0, 0)),
            pl.BlockSpec((C, 1, 1), lambda n: (0, 0, 0)),
        ],
        out_specs=pl.BlockSpec((1, C, Ho, Wo), lambda n: (n, 0, 0, 0)),
        compiler_params=pltpu.CompilerParams(
            dimension_semantics=("parallel",)),
    )(xp, w_dw_k, b_dw_k)

    # ------------- BatchNorm2d batch statistics (train mode) -------------
    y32 = y.astype(jnp.float32)
    mean = jnp.mean(y32, axis=(0, 2, 3))            # (C,)
    var = jnp.var(y32, axis=(0, 2, 3))              # biased, as used for normalization
    scale_c = gamma.astype(jnp.float32) * jax.lax.rsqrt(var + eps)   # (C,)
    shift_c = beta.astype(jnp.float32) - mean * scale_c              # (C,)
    scale = scale_c.reshape(C, 1)
    shift = shift_c.reshape(C, 1)

    # ---------- fused BN affine + pointwise 1x1 conv (lane-dense) ----------
    S = Ho * Wo
    y2 = y.reshape(N, C, S)                          # free view, no transpose
    w_pw2 = w_pw.reshape(Cout, C).astype(jnp.float32)
    b_pw2 = b_pw.reshape(Cout, 1).astype(jnp.float32)

    out2 = pl.pallas_call(
        _bn_pointwise_kernel,
        out_shape=jax.ShapeDtypeStruct((N, Cout, S), dtype),
        grid=(N,),
        in_specs=[
            pl.BlockSpec((1, C, S), lambda n: (n, 0, 0)),
            pl.BlockSpec((C, 1), lambda n: (0, 0)),
            pl.BlockSpec((C, 1), lambda n: (0, 0)),
            pl.BlockSpec((Cout, C), lambda n: (0, 0)),
            pl.BlockSpec((Cout, 1), lambda n: (0, 0)),
        ],
        out_specs=pl.BlockSpec((1, Cout, S), lambda n: (n, 0, 0)),
        compiler_params=pltpu.CompilerParams(
            dimension_semantics=("parallel",)),
    )(y2, scale, shift, w_pw2, b_pw2)

    return out2.reshape(N, Cout, Ho, Wo)


def _reference(x, w_dw, b_dw, gamma, beta, w_pw, b_pw, *,
               stride, padding, dilation, eps=1e-5):
    # Pure-JAX reference mirroring the PyTorch forward (BatchNorm in train mode).
    N, C, H, W = x.shape
    Cout = w_pw.shape[0]
    dn = ("NCHW", "OIHW", "NCHW")
    y = jax.lax.conv_general_dilated(
        x, w_dw, window_strides=(stride, stride),
        padding=((padding, padding), (padding, padding)),
        rhs_dilation=(dilation, dilation), dimension_numbers=dn,
        feature_group_count=C, precision=jax.lax.Precision.HIGHEST)
    y = y + b_dw.reshape(1, C, 1, 1)
    mean = jnp.mean(y, axis=(0, 2, 3), keepdims=True)
    var = jnp.var(y, axis=(0, 2, 3), keepdims=True)
    yn = (y - mean) / jnp.sqrt(var + eps)
    yn = yn * gamma.reshape(1, C, 1, 1) + beta.reshape(1, C, 1, 1)
    out = jax.lax.conv_general_dilated(
        yn, w_pw, window_strides=(1, 1), padding="VALID",
        dimension_numbers=dn, precision=jax.lax.Precision.HIGHEST)
    return out + b_pw.reshape(1, Cout, 1, 1)


if __name__ == "__main__":
    N, Cin, H, W = 2, 4, 16, 16
    Cout, ksize, pad, stride, dil = 8, 3, 1, 1, 1

    key = jax.random.PRNGKey(0)
    k1, k2, k3, k4, k5 = jax.random.split(key, 5)
    x = jax.random.normal(k1, (N, Cin, H, W), dtype=jnp.float32)
    w_dw = 0.2 * jax.random.normal(k2, (Cin, 1, ksize, ksize), dtype=jnp.float32)
    b_dw = 0.1 * jax.random.normal(k3, (Cin,), dtype=jnp.float32)
    w_pw = 0.2 * jax.random.normal(k4, (Cout, Cin, 1, 1), dtype=jnp.float32)
    b_pw = 0.1 * jax.random.normal(k5, (Cout,), dtype=jnp.float32)
    gamma = jnp.ones((Cin,), dtype=jnp.float32)   # nn.BatchNorm2d default init
    beta = jnp.zeros((Cin,), dtype=jnp.float32)

    out = depthwise_separable_conv(
        x, w_dw, b_dw, gamma, beta, w_pw, b_pw,
        stride=stride, padding=pad, dilation=dil, eps=1e-5)
    out = jax.block_until_ready(out)

    ref = _reference(x, w_dw, b_dw, gamma, beta, w_pw, b_pw,
                     stride=stride, padding=pad, dilation=dil, eps=1e-5)

    assert out.shape == (N, Cout, H, W), out.shape
    assert jnp.allclose(out, ref, atol=1e-3, rtol=1e-3), float(
        jnp.max(jnp.abs(out - ref)))

    print("KERNEL_OK")
</pallas_src>

<mosaic_0001>
module attributes {stable_mosaic.version = 11 : i64} {
  func.func @_depthwise_conv_kernel(%arg0: i32, %arg1: memref<1x4x18x18xf32, #tpu.memory_space<vmem>>, %arg2: memref<9x4x1x1xf32, #tpu.memory_space<vmem>>, %arg3: memref<4x1x1xf32, #tpu.memory_space<vmem>>, %arg4: memref<1x4x16x16xf32, #tpu.memory_space<vmem>>) attributes {dimension_semantics = [#tpu.dimension_semantics<parallel>], iteration_bounds = array<i64: 2>, scalar_prefetch = 0 : i64, scratch_operands = 0 : i64, tpu.core_type = #tpu.core_type<tc>, window_params = [{transform_indices = @transform_0, window_bounds = array<i64: 1, 4, 18, 18>}, {pipeline_mode = #tpu.pipeline_mode<synchronous>, transform_indices = @transform_1, window_bounds = array<i64: 9, 4, 1, 1>}, {pipeline_mode = #tpu.pipeline_mode<synchronous>, transform_indices = @transform_2, window_bounds = array<i64: 4, 1, 1>}, {transform_indices = @transform_3, window_bounds = array<i64: 1, 4, 16, 16>}]} {
    %c0 = arith.constant 0 : index
    %c0_0 = arith.constant 0 : index
    %c0_1 = arith.constant 0 : index
    %c0_2 = arith.constant 0 : index
    %0 = vector.load %arg1[%c0, %c0_0, %c0_1, %c0_2] : memref<1x4x18x18xf32, #tpu.memory_space<vmem>>, vector<1x4x18x18xf32>
    %1 = vector.shape_cast %0 : vector<1x4x18x18xf32> to vector<4x18x18xf32>
    %c0_3 = arith.constant 0 : index
    %c0_4 = arith.constant 0 : index
    %c0_5 = arith.constant 0 : index
    %c0_6 = arith.constant 0 : index
    %2 = vector.load %arg2[%c0_3, %c0_4, %c0_5, %c0_6] : memref<9x4x1x1xf32, #tpu.memory_space<vmem>>, vector<9x4x1x1xf32>
    %cst = arith.constant 0.000000e+00 : f32
    %3 = vector.broadcast %cst : f32 to vector<4x16x16xf32>
    %4 = vector.extract_strided_slice %1 {offsets = [0, 0, 0], sizes = [4, 16, 16], strides = [1, 1, 1]} : vector<4x18x18xf32> to vector<4x16x16xf32>
    %5 = vector.extract_strided_slice %2 {offsets = [0, 0, 0, 0], sizes = [1, 4, 1, 1], strides = [1, 1, 1, 1]} : vector<9x4x1x1xf32> to vector<1x4x1x1xf32>
    %6 = vector.shape_cast %5 : vector<1x4x1x1xf32> to vector<4x1x1xf32>
    %7 = vector.broadcast %6 : vector<4x1x1xf32> to vector<4x16x16xf32>
    %8 = arith.mulf %4, %7 : vector<4x16x16xf32>
    %9 = arith.addf %3, %8 : vector<4x16x16xf32>
    %10 = vector.extract_strided_slice %1 {offsets = [0, 0, 1], sizes = [4, 16, 16], strides = [1, 1, 1]} : vector<4x18x18xf32> to vector<4x16x16xf32>
    %11 = vector.extract_strided_slice %2 {offsets = [1, 0, 0, 0], sizes = [1, 4, 1, 1], strides = [1, 1, 1, 1]} : vector<9x4x1x1xf32> to vector<1x4x1x1xf32>
    %12 = vector.shape_cast %11 : vector<1x4x1x1xf32> to vector<4x1x1xf32>
    %13 = vector.broadcast %12 : vector<4x1x1xf32> to vector<4x16x16xf32>
    %14 = arith.mulf %10, %13 : vector<4x16x16xf32>
    %15 = arith.addf %9, %14 : vector<4x16x16xf32>
    %16 = vector.extract_strided_slice %1 {offsets = [0, 0, 2], sizes = [4, 16, 16], strides = [1, 1, 1]} : vector<4x18x18xf32> to vector<4x16x16xf32>
    %17 = vector.extract_strided_slice %2 {offsets = [2, 0, 0, 0], sizes = [1, 4, 1, 1], strides = [1, 1, 1, 1]} : vector<9x4x1x1xf32> to vector<1x4x1x1xf32>
    %18 = vector.shape_cast %17 : vector<1x4x1x1xf32> to vector<4x1x1xf32>
    %19 = vector.broadcast %18 : vector<4x1x1xf32> to vector<4x16x16xf32>
    %20 = arith.mulf %16, %19 : vector<4x16x16xf32>
    %21 = arith.addf %15, %20 : vector<4x16x16xf32>
    %22 = vector.extract_strided_slice %1 {offsets = [0, 1, 0], sizes = [4, 16, 16], strides = [1, 1, 1]} : vector<4x18x18xf32> to vector<4x16x16xf32>
    %23 = vector.extract_strided_slice %2 {offsets = [3, 0, 0, 0], sizes = [1, 4, 1, 1], strides = [1, 1, 1, 1]} : vector<9x4x1x1xf32> to vector<1x4x1x1xf32>
    %24 = vector.shape_cast %23 : vector<1x4x1x1xf32> to vector<4x1x1xf32>
    %25 = vector.broadcast %24 : vector<4x1x1xf32> to vector<4x16x16xf32>
    %26 = arith.mulf %22, %25 : vector<4x16x16xf32>
    %27 = arith.addf %21, %26 : vector<4x16x16xf32>
    %28 = vector.extract_strided_slice %1 {offsets = [0, 1, 1], sizes = [4, 16, 16], strides = [1, 1, 1]} : vector<4x18x18xf32> to vector<4x16x16xf32>
    %29 = vector.extract_strided_slice %2 {offsets = [4, 0, 0, 0], sizes = [1, 4, 1, 1], strides = [1, 1, 1, 1]} : vector<9x4x1x1xf32> to vector<1x4x1x1xf32>
    %30 = vector.shape_cast %29 : vector<1x4x1x1xf32> to vector<4x1x1xf32>
    %31 = vector.broadcast %30 : vector<4x1x1xf32> to vector<4x16x16xf32>
    %32 = arith.mulf %28, %31 : vector<4x16x16xf32>
    %33 = arith.addf %27, %32 : vector<4x16x16xf32>
    %34 = vector.extract_strided_slice %1 {offsets = [0, 1, 2], sizes = [4, 16, 16], strides = [1, 1, 1]} : vector<4x18x18xf32> to vector<4x16x16xf32>
    %35 = vector.extract_strided_slice %2 {offsets = [5, 0, 0, 0], sizes = [1, 4, 1, 1], strides = [1, 1, 1, 1]} : vector<9x4x1x1xf32> to vector<1x4x1x1xf32>
    %36 = vector.shape_cast %35 : vector<1x4x1x1xf32> to vector<4x1x1xf32>
    %37 = vector.broadcast %36 : vector<4x1x1xf32> to vector<4x16x16xf32>
    %38 = arith.mulf %34, %37 : vector<4x16x16xf32>
    %39 = arith.addf %33, %38 : vector<4x16x16xf32>
    %40 = vector.extract_strided_slice %1 {offsets = [0, 2, 0], sizes = [4, 16, 16], strides = [1, 1, 1]} : vector<4x18x18xf32> to vector<4x16x16xf32>
    %41 = vector.extract_strided_slice %2 {offsets = [6, 0, 0, 0], sizes = [1, 4, 1, 1], strides = [1, 1, 1, 1]} : vector<9x4x1x1xf32> to vector<1x4x1x1xf32>
    %42 = vector.shape_cast %41 : vector<1x4x1x1xf32> to vector<4x1x1xf32>
    %43 = vector.broadcast %42 : vector<4x1x1xf32> to vector<4x16x16xf32>
    %44 = arith.mulf %40, %43 : vector<4x16x16xf32>
    %45 = arith.addf %39, %44 : vector<4x16x16xf32>
    %46 = vector.extract_strided_slice %1 {offsets = [0, 2, 1], sizes = [4, 16, 16], strides = [1, 1, 1]} : vector<4x18x18xf32> to vector<4x16x16xf32>
    %47 = vector.extract_strided_slice %2 {offsets = [7, 0, 0, 0], sizes = [1, 4, 1, 1], strides = [1, 1, 1, 1]} : vector<9x4x1x1xf32> to vector<1x4x1x1xf32>
    %48 = vector.shape_cast %47 : vector<1x4x1x1xf32> to vector<4x1x1xf32>
    %49 = vector.broadcast %48 : vector<4x1x1xf32> to vector<4x16x16xf32>
    %50 = arith.mulf %46, %49 : vector<4x16x16xf32>
    %51 = arith.addf %45, %50 : vector<4x16x16xf32>
    %52 = vector.extract_strided_slice %1 {offsets = [0, 2, 2], sizes = [4, 16, 16], strides = [1, 1, 1]} : vector<4x18x18xf32> to vector<4x16x16xf32>
    %53 = vector.extract_strided_slice %2 {offsets = [8, 0, 0, 0], sizes = [1, 4, 1, 1], strides = [1, 1, 1, 1]} : vector<9x4x1x1xf32> to vector<1x4x1x1xf32>
    %54 = vector.shape_cast %53 : vector<1x4x1x1xf32> to vector<4x1x1xf32>
    %55 = vector.broadcast %54 : vector<4x1x1xf32> to vector<4x16x16xf32>
    %56 = arith.mulf %52, %55 : vector<4x16x16xf32>
    %57 = arith.addf %51, %56 : vector<4x16x16xf32>
    %c0_7 = arith.constant 0 : index
    %c0_8 = arith.constant 0 : index
    %c0_9 = arith.constant 0 : index
    %58 = vector.load %arg3[%c0_7, %c0_8, %c0_9] : memref<4x1x1xf32, #tpu.memory_space<vmem>>, vector<4x1x1xf32>
    %59 = vector.broadcast %58 : vector<4x1x1xf32> to vector<4x16x16xf32>
    %60 = arith.addf %57, %59 : vector<4x16x16xf32>
    %c0_10 = arith.constant 0 : index
    %c0_11 = arith.constant 0 : index
    %c0_12 = arith.constant 0 : index
    %c0_13 = arith.constant 0 : index
    %61 = vector.load %arg4[%c0_10, %c0_11, %c0_12, %c0_13] : memref<1x4x16x16xf32, #tpu.memory_space<vmem>>, vector<1x4x16x16xf32>
    %62 = vector.shape_cast %61 : vector<1x4x16x16xf32> to vector<4x16x16xf32>
    %63 = vector.shape_cast %60 : vector<4x16x16xf32> to vector<1x4x16x16xf32>
    tpu.vector_store %arg4[%c0_10, %c0_11, %c0_12, %c0_13], %63 {strides = array<i32>} : memref<1x4x16x16xf32, #tpu.memory_space<vmem>>, vector<1x4x16x16xf32>,
    return
  }
  func.func @transform_0(%arg0: i32) -> (i32, i32, i32, i32) {
    %c0_i32 = arith.constant 0 : i32
    %c0_i32_0 = arith.constant 0 : i32
    %c0_i32_1 = arith.constant 0 : i32
    %c0_i32_2 = arith.constant 0 : i32
    return %arg0, %c0_i32, %c0_i32_0, %c0_i32_1 : i32, i32, i32, i32
  }
  func.func @transform_1(%arg0: i32) -> (i32, i32, i32, i32) {
    %c0_i32 = arith.constant 0 : i32
    %c0_i32_0 = arith.constant 0 : i32
    %c0_i32_1 = arith.constant 0 : i32
    %c0_i32_2 = arith.constant 0 : i32
    %c0_i32_3 = arith.constant 0 : i32
    return %c0_i32, %c0_i32_0, %c0_i32_1, %c0_i32_2 : i32, i32, i32, i32
  }
  func.func @transform_2(%arg0: i32) -> (i32, i32, i32) {
    %c0_i32 = arith.constant 0 : i32
    %c0_i32_0 = arith.constant 0 : i32
    %c0_i32_1 = arith.constant 0 : i32
    %c0_i32_2 = arith.constant 0 : i32
    return %c0_i32, %c0_i32_0, %c0_i32_1 : i32, i32, i32
  }
  func.func @transform_3(%arg0: i32) -> (i32, i32, i32, i32) {
    %c0_i32 = arith.constant 0 : i32
    %c0_i32_0 = arith.constant 0 : i32
    %c0_i32_1 = arith.constant 0 : i32
    %c0_i32_2 = arith.constant 0 : i32
    return %arg0, %c0_i32, %c0_i32_0, %c0_i32_1 : i32, i32, i32, i32
  }
}

</mosaic_0001>

<llo_original>
// kernel: tpu_custom_call.1
$region0: #{tpu_custom_call.1}
  #allocation0 [shape = 'u32[]', space=smem, size = 0x4, offset = 0x4, fixed_abs, tag = 'smem constant byte address 0x4 - core index']
  #allocation1 [shape = 'u32[144,128]{1,0:T(1,128)}', space=vmem, size = 0x12000, scoped, tag = 'internal scratch']
  %s0 = inlined_call_operand.vmem [shape: f32[2,4,18,18], index: 0, kind: input, shape index: {}]
  %s1 = inlined_call_operand.vmem [shape: f32[9,4,1,1], index: 1, kind: input, shape index: {}]
  %s2 = inlined_call_operand.vmem [shape: f32[4,1,1], index: 2, kind: input, shape index: {}]
  %s3 = inlined_call_operand.hbm [shape: f32[2,4,16,16], index: 3, kind: output, shape index: {}]
  %s4 = sld [smem:[#allocation0]]
  $region45: #{tpu_custom_call.1} parent=0
    _
  %s6 = ssub.s32 1, %s4
  %s7 = scalar_select 0, %s6, %s4
  $region1: #{tpu_custom_call.1} parent=0
    #allocation2 [shape = 'u8[65536]{0}', space=vmem, size = 0x10000, scoped, tag = 'output window, operand 0']
    #allocation3 [shape = 's32[2]{0}', space=sflag, size = 0x8, scoped, tag = 'scoped memory for tpu_custom_call.1']
    %8 = vsyncpa [#allocation3], 0
    %s9 = scalar_lea.sflag [#allocation3], 1
    %10 = vsyncpa %s9, 0
    loop: start=0, step=1, limit=4
    $region2: #{tpu_custom_call.1} parent=1 // loop_pre_header
      _
    $region3: #{tpu_custom_call.1} parent=1 // loop_header
      %s12 = sphi 0, %s16
      %p13 = scmp.ge.s32.totalorder %s12, 4
      %s22 = sphi 0, %s24
      %s25 = sphi 0, %s22
      %s26 = sphi 0, %s25
      %s42 = sphi 0, %s26
      %s46 = sphi 0, %s46
      %s48 = sphi 0, %s46
      %s49 = sphi 0, %s48
      %s63 = sphi 0, %s49
      %s67 = sphi 0, %s67
      %s69 = sphi 0, %s67
      %s70 = sphi 0, %s69
      %s84 = sphi 0, %s70
      %s90 = sphi 0, %s92
      %s93 = sphi 0, %s90
      %s94 = sphi 0, %s93
      %s110 = sphi 0, %s94
    $region4: #{tpu_custom_call.1} parent=1 // loop_header_branch
      %15 = sbr.rel (%p13) target = $region8
    $region5: #{tpu_custom_call.1} parent=1 // loop_body
      %s17 = ssub.s32 %s12, 1
      %s18 = ssub.s32 %s12, 2
      %s19 = sadd.s32 %s12, 1
      %s20 = ssub.s32 %s12, %s19
      %p21 = scmp.eq.s32.totalorder %s20, 0
      %s23 = sadd.s32 %s22, 1
      %s24 = scalar_select %p21, %s22, %s23
      %p27 = pneg %p21
      %p28 = scmp.eq.s32.totalorder %s12, 1
      %p29 = por %p27, %p28
      %p30 = scmp.ne.s32.totalorder %s22, %s25
      %p31 = scmp.eq.s32.totalorder %s12, 0
      %p32 = por %p30, %p31
      %p33 = scmp.ne.s32.totalorder %s22, %s25
      %p34 = scmp.eq.s32.totalorder %s17, 1
      %p35 = por %p33, %p34
      %p36 = scmp.ne.s32.totalorder %s25, %s26
      %p37 = scmp.eq.s32.totalorder %s17, 0
      %p38 = por %p36, %p37
      %p39 = scmp.ne.s32.totalorder %s25, %s26
      %p40 = scmp.eq.s32.totalorder %s18, 1
      %p41 = por %p39, %p40
      %p43 = scmp.ne.s32.totalorder %s26, %s42
      %p44 = scmp.eq.s32.totalorder %s18, 0
      %p45 = por %p43, %p44
      %s47 = sadd.s32 %s46, 1
      %p50 = scmp.eq.s32.totalorder %s12, 1
      %p51 = scmp.ne.s32.totalorder %s46, %s48
      %p52 = scmp.eq.s32.totalorder %s12, 0
      %p53 = por %p51, %p52
      %p54 = scmp.ne.s32.totalorder %s46, %s48
      %p55 = scmp.eq.s32.totalorder %s17, 1
      %p56 = por %p54, %p55
      %p57 = scmp.ne.s32.totalorder %s48, %s49
      %p58 = scmp.eq.s32.totalorder %s17, 0
      %p59 = por %p57, %p58
      %p60 = scmp.ne.s32.totalorder %s48, %s49
      %p61 = scmp.eq.s32.totalorder %s18, 1
      %p62 = por %p60, %p61
      %p64 = scmp.ne.s32.totalorder %s49, %s63
      %p65 = scmp.eq.s32.totalorder %s18, 0
      %p66 = por %p64, %p65
      %s68 = sadd.s32 %s67, 1
      %p71 = scmp.eq.s32.totalorder %s12, 1
      %p72 = scmp.ne.s32.totalorder %s67, %s69
      %p73 = scmp.eq.s32.totalorder %s12, 0
      %p74 = por %p72, %p73
      %p75 = scmp.ne.s32.totalorder %s67, %s69
      %p76 = scmp.eq.s32.totalorder %s17, 1
      %p77 = por %p75, %p76
      %p78 = scmp.ne.s32.totalorder %s69, %s70
      %p79 = scmp.eq.s32.totalorder %s17, 0
      %p80 = por %p78, %p79
      %p81 = scmp.ne.s32.totalorder %s69, %s70
      %p82 = scmp.eq.s32.totalorder %s18, 1
      %p83 = por %p81, %p82
      %p85 = scmp.ne.s32.totalorder %s70, %s84
      %p86 = scmp.eq.s32.totalorder %s18, 0
      %p87 = por %p85, %p86
      %s88 = ssub.s32 %s12, %s19
      %p89 = scmp.eq.s32.totalorder %s88, 0
      %s91 = sadd.s32 %s90, 1
      %s92 = scalar_select %p89, %s90, %s91
      %p95 = pneg %p89
      %p96 = scmp.eq.s32.totalorder %s12, 1
      %p97 = por %p95, %p96
      %p98 = scmp.ne.s32.totalorder %s90, %s93
      %p99 = scmp.eq.s32.totalorder %s12, 0
      %p100 = por %p98, %p99
      %p101 = scmp.ne.s32.totalorder %s90, %s93
      %p102 = scmp.eq.s32.totalorder %s17, 1
      %p103 = por %p101, %p102
      %p104 = scmp.ne.s32.totalorder %s93, %s94
      %p105 = scmp.eq.s32.totalorder %s17, 0
      %p106 = por %p104, %p105
      %p107 = scmp.ne.s32.totalorder %s93, %s94
      %p108 = scmp.eq.s32.totalorder %s18, 1
      %p109 = por %p107, %p108
      %p111 = scmp.ne.s32.totalorder %s94, %s110
      %p112 = scmp.eq.s32.totalorder %s18, 0
      %p113 = por %p111, %p112
      %p114 = scmp.le.s32.totalorder 1, %s12
      %p115 = scmp.lt.s32.totalorder %s12, 3
      %p116 = pnand %p114, %p115
      %p117 = pneg %p116
      // Predicated region
      $region9: #{tpu_custom_call.1} parent=5 // pred_check
        _
      $region10: #{tpu_custom_call.1} parent=5 // pred_check_branch
        %119 = sbr.rel (%p116) target = $region12
      $region11: #{tpu_custom_call.1} parent=5 // pred_region
        %s120 = ssub.s32 %s12, 1
        // Predicated region
        $region13: #{tpu_custom_call.1} parent=11 // pred_check
          %p121 = pneg %p59
        $region14: #{tpu_custom_call.1} parent=11 // pred_check_branch
          %123 = sbr.rel (%p121) target = $region16
        $region15: #{tpu_custom_call.1} parent=11 // pred_region
          _
        $region16: #{tpu_custom_call.1} parent=11 // pred_fallthru
          _
        // Predicated region
        $region17: #{tpu_custom_call.1} parent=11 // pred_check
          %p124 = pneg %p80
        $region18: #{tpu_custom_call.1} parent=11 // pred_check_branch
          %126 = sbr.rel (%p124) target = $region20
        $region19: #{tpu_custom_call.1} parent=11 // pred_region
          _
        $region20: #{tpu_custom_call.1} parent=11 // pred_fallthru
          _
      $region12: #{tpu_custom_call.1} parent=5 // pred_fallthru
        _
      %p127 = scmp.lt.s32.totalorder %s12, 2
      // Predicated region
      $region21: #{tpu_custom_call.1} parent=5 // pred_check
        %p128 = pneg %p127
      $region22: #{tpu_custom_call.1} parent=5 // pred_check_branch
        %130 = sbr.rel (%p128) target = $region24
      $region23: #{tpu_custom_call.1} parent=5 // pred_region
        // Predicated region
        $region25: #{tpu_custom_call.1} parent=23 // pred_check
          %p131 = pneg %p32
        $region26: #{tpu_custom_call.1} parent=23 // pred_check_branch
          %133 = sbr.rel (%p131) target = $region28
        $region27: #{tpu_custom_call.1} parent=23 // pred_region
          %p134 = scmp.lt.s32.totalorder %s12, 1
          %s135 = scalar_select %p134, %s12, 1
          %s136 = smul.addr %s135, 12
          %s137 = smul.addr %s136, 8
          %s138 = scalar_lea.vmem %s0, %s137
        $region28: #{tpu_custom_call.1} parent=23 // pred_fallthru
          _
      $region24: #{tpu_custom_call.1} parent=5 // pred_fallthru
        _
      %p139 = scmp.le.s32.totalorder 1, %s12
      %p140 = scmp.lt.s32.totalorder %s12, 3
      %p141 = pnand %p139, %p140
      %p142 = pneg %p141
      // Predicated region
      $region29: #{tpu_custom_call.1} parent=5 // pred_check
        _
      $region30: #{tpu_custom_call.1} parent=5 // pred_check_branch
        %144 = sbr.rel (%p141) target = $region32
      $region31: #{tpu_custom_call.1} parent=5 // pred_region
        %s145 = ssub.s32 %s12, 1
        %p146 = scmp.lt.s32.totalorder %s17, 1
        %s147 = scalar_select %p146, %s17, 1
        %s148 = smul.addr %s147, 12
        %s149 = smul.addr %s148, 8
        %s150 = scalar_lea.vmem %s0, %s149
        %p151 = pneg %p38
        %p152 = pneg %p35
        %p153 = pneg %p59
        %p154 = pneg %p56
        %p155 = pneg %p80
        %p156 = pneg %p77
        %p157 = pneg %p106
        %p158 = pneg %p103
        %s159 = sand.u32 %s93, 1
        %s160 = scalar_lea.sflag [#allocation3], %s159
        %s161 = sand.u32 %s93, 1
        %s162 = smul.addr %s161, 64
        %s163 = scalar_lea.vmem [#allocation2], %s162
        %p164 = scmp.lt.s32.totalorder %s17, 1
        %s165 = scalar_select %p164, %s17, 1
        %s166 = smul.addr %s165, 12
        %s167 = smul.addr %s166, 8
        %s168 = scalar_lea.vmem %s0, %s167
        %v169 = vld [vmem:[%s168] sm:$0xff]
        %v170 = vld [vmem:[%s168 + $0x8] sm:$0xff]
        %v171 = vld [vmem:[%s168 + $0x10] sm:$0x3]
        %v172 = vld [vmem:[%s168 + $0x18] sm:$0xff]
        %v173 = vld [vmem:[%s168 + $0x20] sm:$0xff]
        %v174 = vld [vmem:[%s168 + $0x28] sm:$0x3]
        %v175 = vld [vmem:[%s168 + $0x30] sm:$0xff]
        %v176 = vld [vmem:[%s168 + $0x38] sm:$0xff]
        %v177 = vld [vmem:[%s168 + $0x40] sm:$0x3]
        %v178 = vld [vmem:[%s168 + $0x48] sm:$0xff]
        %v179 = vld [vmem:[%s168 + $0x50] sm:$0xff]
        %v180 = vld [vmem:[%s168 + $0x58] sm:$0x3]
        %v181 = vld [vmem:[%s1] sm:$0x1]
        %v182 = vld [vmem:[%s1 + $0x1] sm:$0x1]
        %v183 = vld [vmem:[%s1 + $0x2] sm:$0x1]
        %v184 = vld [vmem:[%s1 + $0x3] sm:$0x1]
        %v185 = vld [vmem:[%s1 + $0x4] sm:$0x1]
        %v186 = vld [vmem:[%s1 + $0x5] sm:$0x1]
        %v187 = vld [vmem:[%s1 + $0x6] sm:$0x1]
        %v188 = vld [vmem:[%s1 + $0x7] sm:$0x1]
        %v189 = vld [vmem:[%s1 + $0x8] sm:$0x1]
        %v190 = vld [vmem:[%s1 + $0x9] sm:$0x1]
        %v191 = vld [vmem:[%s1 + $0xa] sm:$0x1]
        %v192 = vld [vmem:[%s1 + $0xb] sm:$0x1]
        %v193 = vld [vmem:[%s1 + $0xc] sm:$0x1]
        %v194 = vld [vmem:[%s1 + $0xd] sm:$0x1]
        %v195 = vld [vmem:[%s1 + $0xe] sm:$0x1]
        %v196 = vld [vmem:[%s1 + $0xf] sm:$0x1]
        %v197 = vld [vmem:[%s1 + $0x10] sm:$0x1]
        %v198 = vld [vmem:[%s1 + $0x11] sm:$0x1]
        %v199 = vld [vmem:[%s1 + $0x12] sm:$0x1]
        %v200 = vld [vmem:[%s1 + $0x13] sm:$0x1]
        %v201 = vld [vmem:[%s1 + $0x14] sm:$0x1]
        %v202 = vld [vmem:[%s1 + $0x15] sm:$0x1]
        %v203 = vld [vmem:[%s1 + $0x16] sm:$0x1]
        %v204 = vld [vmem:[%s1 + $0x17] sm:$0x1]
        %v205 = vld [vmem:[%s1 + $0x18] sm:$0x1]
        %v206 = vld [vmem:[%s1 + $0x19] sm:$0x1]
        %v207 = vld [vmem:[%s1 + $0x1a] sm:$0x1]
        %v208 = vld [vmem:[%s1 + $0x1b] sm:$0x1]
        %v209 = vld [vmem:[%s1 + $0x1c] sm:$0x1]
        %v210 = vld [vmem:[%s1 + $0x1d] sm:$0x1]
        %v211 = vld [vmem:[%s1 + $0x1e] sm:$0x1]
        %v212 = vld [vmem:[%s1 + $0x1f] sm:$0x1]
        %v213 = vld [vmem:[%s1 + $0x20] sm:$0x1]
        %v214 = vld [vmem:[%s1 + $0x21] sm:$0x1]
        %v215 = vld [vmem:[%s1 + $0x22] sm:$0x1]
        %v216 = vld [vmem:[%s1 + $0x23] sm:$0x1]
        %v221 = vlaneseq
        %v222 = vshrl.u32 %v221, 7
        %v223 = vsub.s32 0, %v222
        %v224 = vrot.slane %v181, %v223
        %v225 = vlaneseq
        %v226 = vshrl.u32 %v225, 7
        %v227 = vsub.s32 0, %v226
        %v228 = vrot.slane %v182, %v227
        %v229 = vlaneseq
        %v230 = vshrl.u32 %v229, 7
        %v231 = vsub.s32 0, %v230
        %v232 = vrot.slane %v183, %v231
        %v233 = vlaneseq
        %v234 = vshrl.u32 %v233, 7
        %v235 = vsub.s32 0, %v234
        %v236 = vrot.slane %v184, %v235
        %237 = vset.pattern.permute.xlu0 0
        %238 = vperm.xlu0 %237, %v224
        %v239 = vpop.permute.xlu0 %238
        %241 = vset.pattern.permute.xlu0 0
        %242 = vperm.xlu0 %241, %v228
        %v243 = vpop.permute.xlu0 %242
        %245 = vset.pattern.permute.xlu0 0
        %246 = vperm.xlu0 %245, %v232
        %v247 = vpop.permute.xlu0 %246
        %249 = vset.pattern.permute.xlu0 0
        %250 = vperm.xlu0 %249, %v236
        %v251 = vpop.permute.xlu0 %250
        %v253 = vmul.f32 %v169, %v239
        %v254 = vmul.f32 %v170, %v239
        %v255 = vmul.f32 %v172, %v243
        %v256 = vmul.f32 %v173, %v243
        %v257 = vmul.f32 %v175, %v247
        %v258 = vmul.f32 %v176, %v247
        %v259 = vmul.f32 %v178, %v251
        %v260 = vmul.f32 %v179, %v251
        %v261 = vadd.f32 %v253, 0.0
        %v262 = vadd.f32 %v254, 0.0
        %v263 = vadd.f32 %v255, 0.0
        %v264 = vadd.f32 %v256, 0.0
        %v265 = vadd.f32 %v257, 0.0
        %v266 = vadd.f32 %v258, 0.0
        %v267 = vadd.f32 %v259, 0.0
        %v268 = vadd.f32 %v260, 0.0
        %v273 = vlaneseq
        %v274 = vshrl.u32 %v273, 7
        %v275 = vsub.s32 0, %v274
        %v276 = vrot.slane %v185, %v275
        %v277 = vlaneseq
        %v278 = vshrl.u32 %v277, 7
        %v279 = vsub.s32 0, %v278
        %v280 = vrot.slane %v186, %v279
        %v281 = vlaneseq
        %v282 = vshrl.u32 %v281, 7
        %v283 = vsub.s32 0, %v282
        %v284 = vrot.slane %v187, %v283
        %v285 = vlaneseq
        %v286 = vshrl.u32 %v285, 7
        %v287 = vsub.s32 0, %v286
        %v288 = vrot.slane %v188, %v287
        %289 = vset.pattern.permute.xlu0 0
        %290 = vperm.xlu0 %289, %v276
        %v291 = vpop.permute.xlu0 %290
        %293 = vset.pattern.permute.xlu0 0
        %294 = vperm.xlu0 %293, %v280
        %v295 = vpop.permute.xlu0 %294
        %297 = vset.pattern.permute.xlu0 0
        %298 = vperm.xlu0 %297, %v284
        %v299 = vpop.permute.xlu0 %298
        %301 = vset.pattern.permute.xlu0 0
        %302 = vperm.xlu0 %301, %v288
        %v303 = vpop.permute.xlu0 %302
        %v305 = vmul.f32 %v169, %v291
        %v306 = vmul.f32 %v170, %v291
        %v307 = vmul.f32 %v172, %v295
        %v308 = vmul.f32 %v173, %v295
        %v309 = vmul.f32 %v175, %v299
        %v310 = vmul.f32 %v176, %v299
        %v311 = vmul.f32 %v178, %v303
        %v312 = vmul.f32 %v179, %v303
        %321 = vrot.lane.b32.xlu0 %v305, 127
        %v322 = vpop.permute.xlu0 %321
        %323 = vrot.lane.b32.xlu0 %v306, 127
        %v324 = vpop.permute.xlu0 %323
        %325 = vrot.lane.b32.xlu0 %v307, 127
        %v326 = vpop.permute.xlu0 %325
        %327 = vrot.lane.b32.xlu0 %v308, 127
        %v328 = vpop.permute.xlu0 %327
        %329 = vrot.lane.b32.xlu0 %v309, 127
        %v330 = vpop.permute.xlu0 %329
        %331 = vrot.lane.b32.xlu0 %v310, 127
        %v332 = vpop.permute.xlu0 %331
        %333 = vrot.lane.b32.xlu0 %v311, 127
        %v334 = vpop.permute.xlu0 %333
        %335 = vrot.lane.b32.xlu0 %v312, 127
        %v336 = vpop.permute.xlu0 %335
        %v345 = vadd.f32 %v261, %v322
        %v346 = vadd.f32 %v262, %v324
        %v347 = vadd.f32 %v263, %v326
        %v348 = vadd.f32 %v264, %v328
        %v349 = vadd.f32 %v265, %v330
        %v350 = vadd.f32 %v266, %v332
        %v351 = vadd.f32 %v267, %v334
        %v352 = vadd.f32 %v268, %v336
        %v357 = vlaneseq
        %v358 = vshrl.u32 %v357, 7
        %v359 = vsub.s32 0, %v358
        %v360 = vrot.slane %v189, %v359
        %v361 = vlaneseq
        %v362 = vshrl.u32 %v361, 7
        %v363 = vsub.s32 0, %v362
        %v364 = vrot.slane %v190, %v363
        %v365 = vlaneseq
        %v366 = vshrl.u32 %v365, 7
        %v367 = vsub.s32 0, %v366
        %v368 = vrot.slane %v191, %v367
        %v369 = vlaneseq
        %v370 = vshrl.u32 %v369, 7
        %v371 = vsub.s32 0, %v370
        %v372 = vrot.slane %v192, %v371
        %373 = vset.pattern.permute.xlu0 0
        %374 = vperm.xlu0 %373, %v360
        %v375 = vpop.permute.xlu0 %374
        %377 = vset.pattern.permute.xlu0 0
        %378 = vperm.xlu0 %377, %v364
        %v379 = vpop.permute.xlu0 %378
        %381 = vset.pattern.permute.xlu0 0
        %382 = vperm.xlu0 %381, %v368
        %v383 = vpop.permute.xlu0 %382
        %385 = vset.pattern.permute.xlu0 0
        %386 = vperm.xlu0 %385, %v372
        %v387 = vpop.permute.xlu0 %386
        %v389 = vmul.f32 %v169, %v375
        %v390 = vmul.f32 %v170, %v375
        %v391 = vmul.f32 %v172, %v379
        %v392 = vmul.f32 %v173, %v379
        %v393 = vmul.f32 %v175, %v383
        %v394 = vmul.f32 %v176, %v383
        %v395 = vmul.f32 %v178, %v387
        %v396 = vmul.f32 %v179, %v387
        %405 = vrot.lane.b32.xlu0 %v389, 126
        %v406 = vpop.permute.xlu0 %405
        %407 = vrot.lane.b32.xlu0 %v390, 126
        %v408 = vpop.permute.xlu0 %407
        %409 = vrot.lane.b32.xlu0 %v391, 126
        %v410 = vpop.permute.xlu0 %409
        %411 = vrot.lane.b32.xlu0 %v392, 126
        %v412 = vpop.permute.xlu0 %411
        %413 = vrot.lane.b32.xlu0 %v393, 126
        %v414 = vpop.permute.xlu0 %413
        %415 = vrot.lane.b32.xlu0 %v394, 126
        %v416 = vpop.permute.xlu0 %415
        %417 = vrot.lane.b32.xlu0 %v395, 126
        %v418 = vpop.permute.xlu0 %417
        %419 = vrot.lane.b32.xlu0 %v396, 126
        %v420 = vpop.permute.xlu0 %419
        %v429 = vadd.f32 %v345, %v406
        %v430 = vadd.f32 %v346, %v408
        %v431 = vadd.f32 %v347, %v410
        %v432 = vadd.f32 %v348, %v412
        %v433 = vadd.f32 %v349, %v414
        %v434 = vadd.f32 %v350, %v416
        %v435 = vadd.f32 %v351, %v418
        %v436 = vadd.f32 %v352, %v420
        %v441 = vlaneseq
        %v442 = vshrl.u32 %v441, 7
        %v443 = vsub.s32 0, %v442
        %v444 = vrot.slane %v193, %v443
        %v445 = vlaneseq
        %v446 = vshrl.u32 %v445, 7
        %v447 = vsub.s32 0, %v446
        %v448 = vrot.slane %v194, %v447
        %v449 = vlaneseq
        %v450 = vshrl.u32 %v449, 7
        %v451 = vsub.s32 0, %v450
        %v452 = vrot.slane %v195, %v451
        %v453 = vlaneseq
        %v454 = vshrl.u32 %v453, 7
        %v455 = vsub.s32 0, %v454
        %v456 = vrot.slane %v196, %v455
        %457 = vset.pattern.permute.xlu0 0
        %458 = vperm.xlu0 %457, %v444
        %v459 = vpop.permute.xlu0 %458
        %461 = vset.pattern.permute.xlu0 0
        %462 = vperm.xlu0 %461, %v448
        %v463 = vpop.permute.xlu0 %462
        %465 = vset.pattern.permute.xlu0 0
        %466 = vperm.xlu0 %465, %v452
        %v467 = vpop.permute.xlu0 %466
        %469 = vset.pattern.permute.xlu0 0
        %470 = vperm.xlu0 %469, %v456
        %v471 = vpop.permute.xlu0 %470
        %v473 = vmul.f32 %v169, %v459
        %v474 = vmul.f32 %v170, %v459
        %v475 = vmul.f32 %v171, %v459
        %v476 = vmul.f32 %v172, %v463
        %v477 = vmul.f32 %v173, %v463
        %v478 = vmul.f32 %v174, %v463
        %v479 = vmul.f32 %v175, %v467
        %v480 = vmul.f32 %v176, %v467
        %v481 = vmul.f32 %v177, %v467
        %v482 = vmul.f32 %v178, %v471
        %v483 = vmul.f32 %v179, %v471
        %v484 = vmul.f32 %v180, %v471
        %vm497 = vcmask 1046528
        %v498 = vrot.slane %v473, 1
        %v499 = vrot.slane %v474, 1
        %v500 = vsel %vm497, %v498, %v499
        %v501 = vrot.slane %v475, 1
        %v502 = vsel %vm497, %v499, %v501
        %v503 = vrot.slane %v476, 1
        %v504 = vrot.slane %v477, 1
        %v505 = vsel %vm497, %v503, %v504
        %v506 = vrot.slane %v478, 1
        %v507 = vsel %vm497, %v504, %v506
        %v508 = vrot.slane %v479, 1
        %v509 = vrot.slane %v480, 1
        %v510 = vsel %vm497, %v508, %v509
        %v511 = vrot.slane %v481, 1
        %v512 = vsel %vm497, %v509, %v511
        %v513 = vrot.slane %v482, 1
        %v514 = vrot.slane %v483, 1
        %v515 = vsel %vm497, %v513, %v514
        %v516 = vrot.slane %v484, 1
        %v517 = vsel %vm497, %v514, %v516
        %v526 = vadd.f32 %v429, %v500
        %v527 = vadd.f32 %v430, %v502
        %v528 = vadd.f32 %v431, %v505
        %v529 = vadd.f32 %v432, %v507
        %v530 = vadd.f32 %v433, %v510
        %v531 = vadd.f32 %v434, %v512
        %v532 = vadd.f32 %v435, %v515
        %v533 = vadd.f32 %v436, %v517
        %v538 = vlaneseq
        %v539 = vshrl.u32 %v538, 7
        %v540 = vsub.s32 0, %v539
        %v541 = vrot.slane %v197, %v540
        %v542 = vlaneseq
        %v543 = vshrl.u32 %v542, 7
        %v544 = vsub.s32 0, %v543
        %v545 = vrot.slane %v198, %v544
        %v546 = vlaneseq
        %v547 = vshrl.u32 %v546, 7
        %v548 = vsub.s32 0, %v547
        %v549 = vrot.slane %v199, %v548
        %v550 = vlaneseq
        %v551 = vshrl.u32 %v550, 7
        %v552 = vsub.s32 0, %v551
        %v553 = vrot.slane %v200, %v552
        %554 = vset.pattern.permute.xlu0 0
        %555 = vperm.xlu0 %554, %v541
        %v556 = vpop.permute.xlu0 %555
        %558 = vset.pattern.permute.xlu0 0
        %559 = vperm.xlu0 %558, %v545
        %v560 = vpop.permute.xlu0 %559
        %562 = vset.pattern.permute.xlu0 0
        %563 = vperm.xlu0 %562, %v549
        %v564 = vpop.permute.xlu0 %563
        %566 = vset.pattern.permute.xlu0 0
        %567 = vperm.xlu0 %566, %v553
        %v568 = vpop.permute.xlu0 %567
        %v570 = vmul.f32 %v169, %v556
        %v571 = vmul.f32 %v170, %v556
        %v572 = vmul.f32 %v171, %v556
        %v573 = vmul.f32 %v172, %v560
        %v574 = vmul.f32 %v173, %v560
        %v575 = vmul.f32 %v174, %v560
        %v576 = vmul.f32 %v175, %v564
        %v577 = vmul.f32 %v176, %v564
        %v578 = vmul.f32 %v177, %v564
        %v579 = vmul.f32 %v178, %v568
        %v580 = vmul.f32 %v179, %v568
        %v581 = vmul.f32 %v180, %v568
        %v594 = vrot.slane %v570, 1
        %v595 = vrot.slane %v571, 1
        %v596 = vsel %vm497, %v594, %v595
        %v597 = vrot.slane %v572, 1
        %v598 = vsel %vm497, %v595, %v597
        %v599 = vrot.slane %v573, 1
        %v600 = vrot.slane %v574, 1
        %v601 = vsel %vm497, %v599, %v600
        %v602 = vrot.slane %v575, 1
        %v603 = vsel %vm497, %v600, %v602
        %v604 = vrot.slane %v576, 1
        %v605 = vrot.slane %v577, 1
        %v606 = vsel %vm497, %v604, %v605
        %v607 = vrot.slane %v578, 1
        %v608 = vsel %vm497, %v605, %v607
        %v609 = vrot.slane %v579, 1
        %v610 = vrot.slane %v580, 1
        %v611 = vsel %vm497, %v609, %v610
        %v612 = vrot.slane %v581, 1
        %v613 = vsel %vm497, %v610, %v612
        %614 = vrot.lane.b32.xlu0 %v596, 127
        %v615 = vpop.permute.xlu0 %614
        %616 = vrot.lane.b32.xlu0 %v598, 127
        %v617 = vpop.permute.xlu0 %616
        %618 = vrot.lane.b32.xlu0 %v601, 127
        %v619 = vpop.permute.xlu0 %618
        %620 = vrot.lane.b32.xlu0 %v603, 127
        %v621 = vpop.permute.xlu0 %620
        %622 = vrot.lane.b32.xlu0 %v606, 127
        %v623 = vpop.permute.xlu0 %622
        %624 = vrot.lane.b32.xlu0 %v608, 127
        %v625 = vpop.permute.xlu0 %624
        %626 = vrot.lane.b32.xlu0 %v611, 127
        %v627 = vpop.permute.xlu0 %626
        %628 = vrot.lane.b32.xlu0 %v613, 127
        %v629 = vpop.permute.xlu0 %628
        %v638 = vadd.f32 %v526, %v615
        %v639 = vadd.f32 %v527, %v617
        %v640 = vadd.f32 %v528, %v619
        %v641 = vadd.f32 %v529, %v621
        %v642 = vadd.f32 %v530, %v623
        %v643 = vadd.f32 %v531, %v625
        %v644 = vadd.f32 %v532, %v627
        %v645 = vadd.f32 %v533, %v629
        %v650 = vlaneseq
        %v651 = vshrl.u32 %v650, 7
        %v652 = vsub.s32 0, %v651
        %v653 = vrot.slane %v201, %v652
        %v654 = vlaneseq
        %v655 = vshrl.u32 %v654, 7
        %v656 = vsub.s32 0, %v655
        %v657 = vrot.slane %v202, %v656
        %v658 = vlaneseq
        %v659 = vshrl.u32 %v658, 7
        %v660 = vsub.s32 0, %v659
        %v661 = vrot.slane %v203, %v660
        %v662 = vlaneseq
        %v663 = vshrl.u32 %v662, 7
        %v664 = vsub.s32 0, %v663
        %v665 = vrot.slane %v204, %v664
        %666 = vset.pattern.permute.xlu0 0
        %667 = vperm.xlu0 %666, %v653
        %v668 = vpop.permute.xlu0 %667
        %670 = vset.pattern.permute.xlu0 0
        %671 = vperm.xlu0 %670, %v657
        %v672 = vpop.permute.xlu0 %671
        %674 = vset.pattern.permute.xlu0 0
        %675 = vperm.xlu0 %674, %v661
        %v676 = vpop.permute.xlu0 %675
        %678 = vset.pattern.permute.xlu0 0
        %679 = vperm.xlu0 %678, %v665
        %v680 = vpop.permute.xlu0 %679
        %v682 = vmul.f32 %v169, %v668
        %v683 = vmul.f32 %v170, %v668
        %v684 = vmul.f32 %v171, %v668
        %v685 = vmul.f32 %v172, %v672
        %v686 = vmul.f32 %v173, %v672
        %v687 = vmul.f32 %v174, %v672
        %v688 = vmul.f32 %v175, %v676
        %v689 = vmul.f32 %v176, %v676
        %v690 = vmul.f32 %v177, %v676
        %v691 = vmul.f32 %v178, %v680
        %v692 = vmul.f32 %v179, %v680
        %v693 = vmul.f32 %v180, %v680
        %v706 = vrot.slane %v682, 1
        %v707 = vrot.slane %v683, 1
        %v708 = vsel %vm497, %v706, %v707
        %v709 = vrot.slane %v684, 1
        %v710 = vsel %vm497, %v707, %v709
        %v711 = vrot.slane %v685, 1
        %v712 = vrot.slane %v686, 1
        %v713 = vsel %vm497, %v711, %v712
        %v714 = vrot.slane %v687, 1
        %v715 = vsel %vm497, %v712, %v714
        %v716 = vrot.slane %v688, 1
        %v717 = vrot.slane %v689, 1
        %v718 = vsel %vm497, %v716, %v717
        %v719 = vrot.slane %v690, 1
        %v720 = vsel %vm497, %v717, %v719
        %v721 = vrot.slane %v691, 1
        %v722 = vrot.slane %v692, 1
        %v723 = vsel %vm497, %v721, %v722
        %v724 = vrot.slane %v693, 1
        %v725 = vsel %vm497, %v722, %v724
        %726 = vrot.lane.b32.xlu0 %v708, 126
        %v727 = vpop.permute.xlu0 %726
        %728 = vrot.lane.b32.xlu0 %v710, 126
        %v729 = vpop.permute.xlu0 %728
        %730 = vrot.lane.b32.xlu0 %v713, 126
        %v731 = vpop.permute.xlu0 %730
        %732 = vrot.lane.b32.xlu0 %v715, 126
        %v733 = vpop.permute.xlu0 %732
        %734 = vrot.lane.b32.xlu0 %v718, 126
        %v735 = vpop.permute.xlu0 %734
        %736 = vrot.lane.b32.xlu0 %v720, 126
        %v737 = vpop.permute.xlu0 %736
        %738 = vrot.lane.b32.xlu0 %v723, 126
        %v739 = vpop.permute.xlu0 %738
        %740 = vrot.lane.b32.xlu0 %v725, 126
        %v741 = vpop.permute.xlu0 %740
        %v750 = vadd.f32 %v638, %v727
        %v751 = vadd.f32 %v639, %v729
        %v752 = vadd.f32 %v640, %v731
        %v753 = vadd.f32 %v641, %v733
        %v754 = vadd.f32 %v642, %v735
        %v755 = vadd.f32 %v643, %v737
        %v756 = vadd.f32 %v644, %v739
        %v757 = vadd.f32 %v645, %v741
        %v762 = vlaneseq
        %v763 = vshrl.u32 %v762, 7
        %v764 = vsub.s32 0, %v763
        %v765 = vrot.slane %v205, %v764
        %v766 = vlaneseq
        %v767 = vshrl.u32 %v766, 7
        %v768 = vsub.s32 0, %v767
        %v769 = vrot.slane %v206, %v768
        %v770 = vlaneseq
        %v771 = vshrl.u32 %v770, 7
        %v772 = vsub.s32 0, %v771
        %v773 = vrot.slane %v207, %v772
        %v774 = vlaneseq
        %v775 = vshrl.u32 %v774, 7
        %v776 = vsub.s32 0, %v775
        %v777 = vrot.slane %v208, %v776
        %778 = vset.pattern.permute.xlu0 0
        %779 = vperm.xlu0 %778, %v765
        %v780 = vpop.permute.xlu0 %779
        %782 = vset.pattern.permute.xlu0 0
        %783 = vperm.xlu0 %782, %v769
        %v784 = vpop.permute.xlu0 %783
        %786 = vset.pattern.permute.xlu0 0
        %787 = vperm.xlu0 %786, %v773
        %v788 = vpop.permute.xlu0 %787
        %790 = vset.pattern.permute.xlu0 0
        %791 = vperm.xlu0 %790, %v777
        %v792 = vpop.permute.xlu0 %791
        %v794 = vmul.f32 %v169, %v780
        %v795 = vmul.f32 %v170, %v780
        %v796 = vmul.f32 %v171, %v780
        %v797 = vmul.f32 %v172, %v784
        %v798 = vmul.f32 %v173, %v784
        %v799 = vmul.f32 %v174, %v784
        %v800 = vmul.f32 %v175, %v788
        %v801 = vmul.f32 %v176, %v788
        %v802 = vmul.f32 %v177, %v788
        %v803 = vmul.f32 %v178, %v792
        %v804 = vmul.f32 %v179, %v792
        %v805 = vmul.f32 %v180, %v792
        %vm818 = vcmask 1045504
        %v819 = vrot.slane %v794, 2
        %v820 = vrot.slane %v795, 2
        %v821 = vsel %vm818, %v819, %v820
        %v822 = vrot.slane %v796, 2
        %v823 = vsel %vm818, %v820, %v822
        %v824 = vrot.slane %v797, 2
        %v825 = vrot.slane %v798, 2
        %v826 = vsel %vm818, %v824, %v825
        %v827 = vrot.slane %v799, 2
        %v828 = vsel %vm818, %v825, %v827
        %v829 = vrot.slane %v800, 2
        %v830 = vrot.slane %v801, 2
        %v831 = vsel %vm818, %v829, %v830
        %v832 = vrot.slane %v802, 2
        %v833 = vsel %vm818, %v830, %v832
        %v834 = vrot.slane %v803, 2
        %v835 = vrot.slane %v804, 2
        %v836 = vsel %vm818, %v834, %v835
        %v837 = vrot.slane %v805, 2
        %v838 = vsel %vm818, %v835, %v837
        %v847 = vadd.f32 %v750, %v821
        %v848 = vadd.f32 %v751, %v823
        %v849 = vadd.f32 %v752, %v826
        %v850 = vadd.f32 %v753, %v828
        %v851 = vadd.f32 %v754, %v831
        %v852 = vadd.f32 %v755, %v833
        %v853 = vadd.f32 %v756, %v836
        %v854 = vadd.f32 %v757, %v838
        %v859 = vlaneseq
        %v860 = vshrl.u32 %v859, 7
        %v861 = vsub.s32 0, %v860
        %v862 = vrot.slane %v209, %v861
        %v863 = vlaneseq
        %v864 = vshrl.u32 %v863, 7
        %v865 = vsub.s32 0, %v864
        %v866 = vrot.slane %v210, %v865
        %v867 = vlaneseq
        %v868 = vshrl.u32 %v867, 7
        %v869 = vsub.s32 0, %v868
        %v870 = vrot.slane %v211, %v869
        %v871 = vlaneseq
        %v872 = vshrl.u32 %v871, 7
        %v873 = vsub.s32 0, %v872
        %v874 = vrot.slane %v212, %v873
        %875 = vset.pattern.permute.xlu0 0
        %876 = vperm.xlu0 %875, %v862
        %v877 = vpop.permute.xlu0 %876
        %879 = vset.pattern.permute.xlu0 0
        %880 = vperm.xlu0 %879, %v866
        %v881 = vpop.permute.xlu0 %880
        %883 = vset.pattern.permute.xlu0 0
        %884 = vperm.xlu0 %883, %v870
        %v885 = vpop.permute.xlu0 %884
        %887 = vset.pattern.permute.xlu0 0
        %888 = vperm.xlu0 %887, %v874
        %v889 = vpop.permute.xlu0 %888
        %v891 = vmul.f32 %v169, %v877
        %v892 = vmul.f32 %v170, %v877
        %v893 = vmul.f32 %v171, %v877
        %v894 = vmul.f32 %v172, %v881
        %v895 = vmul.f32 %v173, %v881
        %v896 = vmul.f32 %v174, %v881
        %v897 = vmul.f32 %v175, %v885
        %v898 = vmul.f32 %v176, %v885
        %v899 = vmul.f32 %v177, %v885
        %v900 = vmul.f32 %v178, %v889
        %v901 = vmul.f32 %v179, %v889
        %v902 = vmul.f32 %v180, %v889
        %v915 = vrot.slane %v891, 2
        %v916 = vrot.slane %v892, 2
        %v917 = vsel %vm818, %v915, %v916
        %v918 = vrot.slane %v893, 2
        %v919 = vsel %vm818, %v916, %v918
        %v920 = vrot.slane %v894, 2
        %v921 = vrot.slane %v895, 2
        %v922 = vsel %vm818, %v920, %v921
        %v923 = vrot.slane %v896, 2
        %v924 = vsel %vm818, %v921, %v923
        %v925 = vrot.slane %v897, 2
        %v926 = vrot.slane %v898, 2
        %v927 = vsel %vm818, %v925, %v926
        %v928 = vrot.slane %v899, 2
        %v929 = vsel %vm818, %v926, %v928
        %v930 = vrot.slane %v900, 2
        %v931 = vrot.slane %v901, 2
        %v932 = vsel %vm818, %v930, %v931
        %v933 = vrot.slane %v902, 2
        %v934 = vsel %vm818, %v931, %v933
        %935 = vrot.lane.b32.xlu0 %v917, 127
        %v936 = vpop.permute.xlu0 %935
        %937 = vrot.lane.b32.xlu0 %v919, 127
        %v938 = vpop.permute.xlu0 %937
        %939 = vrot.lane.b32.xlu0 %v922, 127
        %v940 = vpop.permute.xlu0 %939
        %941 = vrot.lane.b32.xlu0 %v924, 127
        %v942 = vpop.permute.xlu0 %941
        %943 = vrot.lane.b32.xlu0 %v927, 127
        %v944 = vpop.permute.xlu0 %943
        %945 = vrot.lane.b32.xlu0 %v929, 127
        %v946 = vpop.permute.xlu0 %945
        %947 = vrot.lane.b32.xlu0 %v932, 127
        %v948 = vpop.permute.xlu0 %947
        %949 = vrot.lane.b32.xlu0 %v934, 127
        %v950 = vpop.permute.xlu0 %949
        %v959 = vadd.f32 %v847, %v936
        %v960 = vadd.f32 %v848, %v938
        %v961 = vadd.f32 %v849, %v940
        %v962 = vadd.f32 %v850, %v942
        %v963 = vadd.f32 %v851, %v944
        %v964 = vadd.f32 %v852, %v946
        %v965 = vadd.f32 %v853, %v948
        %v966 = vadd.f32 %v854, %v950
        %v971 = vlaneseq
        %v972 = vshrl.u32 %v971, 7
        %v973 = vsub.s32 0, %v972
        %v974 = vrot.slane %v213, %v973
        %v975 = vlaneseq
        %v976 = vshrl.u32 %v975, 7
        %v977 = vsub.s32 0, %v976
        %v978 = vrot.slane %v214, %v977
        %v979 = vlaneseq
        %v980 = vshrl.u32 %v979, 7
        %v981 = vsub.s32 0, %v980
        %v982 = vrot.slane %v215, %v981
        %v983 = vlaneseq
        %v984 = vshrl.u32 %v983, 7
        %v985 = vsub.s32 0, %v984
        %v986 = vrot.slane %v216, %v985
        %987 = vset.pattern.permute.xlu0 0
        %988 = vperm.xlu0 %987, %v974
        %v989 = vpop.permute.xlu0 %988
        %991 = vset.pattern.permute.xlu0 0
        %992 = vperm.xlu0 %991, %v978
        %v993 = vpop.permute.xlu0 %992
        %995 = vset.pattern.permute.xlu0 0
        %996 = vperm.xlu0 %995, %v982
        %v997 = vpop.permute.xlu0 %996
        %999 = vset.pattern.permute.xlu0 0
        %1000 = vperm.xlu0 %999, %v986
        %v1001 = vpop.permute.xlu0 %1000
        %v1003 = vmul.f32 %v169, %v989
        %v1004 = vmul.f32 %v170, %v989
        %v1005 = vmul.f32 %v171, %v989
        %v1006 = vmul.f32 %v172, %v993
        %v1007 = vmul.f32 %v173, %v993
        %v1008 = vmul.f32 %v174, %v993
        %v1009 = vmul.f32 %v175, %v997
        %v1010 = vmul.f32 %v176, %v997
        %v1011 = vmul.f32 %v177, %v997
        %v1012 = vmul.f32 %v178, %v1001
        %v1013 = vmul.f32 %v179, %v1001
        %v1014 = vmul.f32 %v180, %v1001
        %v1027 = vrot.slane %v1003, 2
        %v1028 = vrot.slane %v1004, 2
        %v1029 = vsel %vm818, %v1027, %v1028
        %v1030 = vrot.slane %v1005, 2
        %v1031 = vsel %vm818, %v1028, %v1030
        %v1032 = vrot.slane %v1006, 2
        %v1033 = vrot.slane %v1007, 2
        %v1034 = vsel %vm818, %v1032, %v1033
        %v1035 = vrot.slane %v1008, 2
        %v1036 = vsel %vm818, %v1033, %v1035
        %v1037 = vrot.slane %v1009, 2
        %v1038 = vrot.slane %v1010, 2
        %v1039 = vsel %vm818, %v1037, %v1038
        %v1040 = vrot.slane %v1011, 2
        %v1041 = vsel %vm818, %v1038, %v1040
        %v1042 = vrot.slane %v1012, 2
        %v1043 = vrot.slane %v1013, 2
        %v1044 = vsel %vm818, %v1042, %v1043
        %v1045 = vrot.slane %v1014, 2
        %v1046 = vsel %vm818, %v1043, %v1045
        %1047 = vrot.lane.b32.xlu0 %v1029, 126
        %v1048 = vpop.permute.xlu0 %1047
        %1049 = vrot.lane.b32.xlu0 %v1031, 126
        %v1050 = vpop.permute.xlu0 %1049
        %1051 = vrot.lane.b32.xlu0 %v1034, 126
        %v1052 = vpop.permute.xlu0 %1051
        %1053 = vrot.lane.b32.xlu0 %v1036, 126
        %v1054 = vpop.permute.xlu0 %1053
        %1055 = vrot.lane.b32.xlu0 %v1039, 126
        %v1056 = vpop.permute.xlu0 %1055
        %1057 = vrot.lane.b32.xlu0 %v1041, 126
        %v1058 = vpop.permute.xlu0 %1057
        %1059 = vrot.lane.b32.xlu0 %v1044, 126
        %v1060 = vpop.permute.xlu0 %1059
        %1061 = vrot.lane.b32.xlu0 %v1046, 126
        %v1062 = vpop.permute.xlu0 %1061
        %v1071 = vadd.f32 %v959, %v1048
        %v1072 = vadd.f32 %v960, %v1050
        %v1073 = vadd.f32 %v961, %v1052
        %v1074 = vadd.f32 %v962, %v1054
        %v1075 = vadd.f32 %v963, %v1056
        %v1076 = vadd.f32 %v964, %v1058
        %v1077 = vadd.f32 %v965, %v1060
        %v1078 = vadd.f32 %v966, %v1062
        %v1079 = vld [vmem:[%s2] sm:$0x1]
        %v1080 = vld [vmem:[%s2 + $0x1] sm:$0x1]
        %v1081 = vld [vmem:[%s2 + $0x2] sm:$0x1]
        %v1082 = vld [vmem:[%s2 + $0x3] sm:$0x1]
        %v1087 = vlaneseq
        %v1088 = vshrl.u32 %v1087, 7
        %v1089 = vsub.s32 0, %v1088
        %v1090 = vrot.slane %v1079, %v1089
        %v1091 = vlaneseq
        %v1092 = vshrl.u32 %v1091, 7
        %v1093 = vsub.s32 0, %v1092
        %v1094 = vrot.slane %v1080, %v1093
        %v1095 = vlaneseq
        %v1096 = vshrl.u32 %v1095, 7
        %v1097 = vsub.s32 0, %v1096
        %v1098 = vrot.slane %v1081, %v1097
        %v1099 = vlaneseq
        %v1100 = vshrl.u32 %v1099, 7
        %v1101 = vsub.s32 0, %v1100
        %v1102 = vrot.slane %v1082, %v1101
        %1103 = vset.pattern.permute.xlu0 0
        %1104 = vperm.xlu0 %1103, %v1090
        %v1105 = vpop.permute.xlu0 %1104
        %1107 = vset.pattern.permute.xlu0 0
        %1108 = vperm.xlu0 %1107, %v1094
        %v1109 = vpop.permute.xlu0 %1108
        %1111 = vset.pattern.permute.xlu0 0
        %1112 = vperm.xlu0 %1111, %v1098
        %v1113 = vpop.permute.xlu0 %1112
        %1115 = vset.pattern.permute.xlu0 0
        %1116 = vperm.xlu0 %1115, %v1102
        %v1117 = vpop.permute.xlu0 %1116
        %v1119 = vadd.f32 %v1071, %v1105
        %v1120 = vadd.f32 %v1072, %v1105
        %v1121 = vadd.f32 %v1073, %v1109
        %v1122 = vadd.f32 %v1074, %v1109
        %v1123 = vadd.f32 %v1075, %v1113
        %v1124 = vadd.f32 %v1076, %v1113
        %v1125 = vadd.f32 %v1077, %v1117
        %v1126 = vadd.f32 %v1078, %v1117
        %vm1127 = vcmask 130048
        %1128 = vst.msk [vmem:[%s163] sm:$0xff] %vm1127, %v1119
        %1129 = vst.msk [vmem:[%s163 + $0x8] sm:$0xff] %vm1127, %v1120
        %1130 = vst.msk [vmem:[%s163 + $0x10] sm:$0xff] %vm1127, %v1121
        %1131 = vst.msk [vmem:[%s163 + $0x18] sm:$0xff] %vm1127, %v1122
        %1132 = vst.msk [vmem:[%s163 + $0x20] sm:$0xff] %vm1127, %v1123
        %1133 = vst.msk [vmem:[%s163 + $0x28] sm:$0xff] %vm1127, %v1124
        %1134 = vst.msk [vmem:[%s163 + $0x30] sm:$0xff] %vm1127, %v1125
        %1135 = vst.msk [vmem:[%s163 + $0x38] sm:$0xff] %vm1127, %v1126
        %s1136 = sand.u32 %s93, 1
        %s1137 = scalar_lea.sflag [#allocation3], %s1136
        %s1138 = sand.u32 %s93, 1
        %s1139 = smul.addr %s1138, 64
        %s1140 = scalar_lea.vmem [#allocation2], %s1139
        // Predicated region
        $region33: #{tpu_custom_call.1} parent=31 // pred_check
          %p1141 = pneg %p103
        $region34: #{tpu_custom_call.1} parent=31 // pred_check_branch
          %1143 = sbr.rel (%p1141) target = $region36
        $region35: #{tpu_custom_call.1} parent=31 // pred_region
          %s1145 = ssub.s32 1024, 1024
          %1146 = vsyncadd %s1137, %s1145
          %s1147 = smul.addr %s17, 8
          %s1148 = smul.addr %s1147, 128
          %s1149 = scalar_lea.hbm %s3, %s1148
          %s1150 = sshll.u32 %s1140, 4
          %s1151 = int_to_ptr.vmem [resolvable:$true] %s1150
          %1156 = dma.vmem_to_hbm [thread:$0]  %s1151, 1024, %s1149, %s1137, 128, 128, 8
        $region36: #{tpu_custom_call.1} parent=31 // pred_fallthru
          _
      $region32: #{tpu_custom_call.1} parent=5 // pred_fallthru
        _
      %p1157 = scmp.le.s32.totalorder 2, %s12
      // Predicated region
      $region37: #{tpu_custom_call.1} parent=5 // pred_check
        %p1158 = pneg %p1157
      $region38: #{tpu_custom_call.1} parent=5 // pred_check_branch
        %1160 = sbr.rel (%p1158) target = $region40
      $region39: #{tpu_custom_call.1} parent=5 // pred_region
        %s1161 = ssub.s32 %s12, 2
        // Predicated region
        $region41: #{tpu_custom_call.1} parent=39 // pred_check
          %p1162 = pneg %p109
        $region42: #{tpu_custom_call.1} parent=39 // pred_check_branch
          %1164 = sbr.rel (%p1162) target = $region44
        $region43: #{tpu_custom_call.1} parent=39 // pred_region
          %s1165 = sand.u32 %s94, 1
          %s1166 = scalar_lea.sflag [#allocation3], %s1165
          %s1167 = sand.u32 %s94, 1
          %s1168 = smul.addr %s1167, 64
          %s1169 = scalar_lea.vmem [#allocation2], %s1168
          %1170 = dma.done %s1166, 1024
        $region44: #{tpu_custom_call.1} parent=39 // pred_fallthru
          _
      $region40: #{tpu_custom_call.1} parent=5 // pred_fallthru
        _
    $region6: #{tpu_custom_call.1} parent=1 // loop_footer
      %s16 = sadd.s32 1, %s12
    $region7: #{tpu_custom_call.1} parent=1 // loop_footer_branch
      %11 = sbr.rel target = $region3
    $region8: #{tpu_custom_call.1} parent=1 // loop_exit
      _
    %1171 = vsyncpa [#allocation3], 1
    %s1172 = scalar_lea.sflag [#allocation3], 1
    %1173 = vsyncpa %s1172, 1

</llo_original>
